<compile_context>
chip_gen: v7x
topology: tpu7x:2x2x1
jax: 0.10.0
libtpu: 0.0.40
codegen_flags: <defaults>
</compile_context>

<pallas_src>
from functools import partial

import jax
import jax.numpy as jnp
from jax.experimental import pallas as pl
from jax.experimental.pallas import tpu as pltpu


def _loss_kernel(t1_ref, t2_ref, w1_ref, w2_ref, o_ref, *, alpha, eps):
    # t1, t2: (B, F)   w1, w2: (O, K)   o: (1, 1)
    t1 = t1_ref[...].astype(jnp.float32)
    t2 = t2_ref[...].astype(jnp.float32)

    # --- cosine similarity along dim=1, summed over the batch ---------------
    dot = jnp.sum(t1 * t2, axis=1, keepdims=True)                 # (B, 1)
    n1 = jnp.sqrt(jnp.sum(t1 * t1, axis=1, keepdims=True))        # (B, 1)
    n2 = jnp.sqrt(jnp.sum(t2 * t2, axis=1, keepdims=True))        # (B, 1)
    denom = jnp.maximum(n1 * n2, eps)                             # torch formula
    cos_sum = jnp.sum(dot / denom, keepdims=True)                 # (1, 1)

    # --- ||w @ w.T - I||_F  (no explicit transpose: contract dim 1 with dim 1)
    def gram_fro(w):
        w = w.astype(jnp.float32)
        g = jax.lax.dot_general(
            w, w,
            dimension_numbers=(((1,), (1,)), ((), ())),           # w @ w.T on MXU
            preferred_element_type=jnp.float32,
        )                                                         # (O, O)
        n = g.shape[0]
        row = jax.lax.broadcasted_iota(jnp.int32, (n, n), 0)
        col = jax.lax.broadcasted_iota(jnp.int32, (n, n), 1)
        d = g - jnp.where(row == col, 1.0, 0.0).astype(jnp.float32)
        return jnp.sqrt(jnp.sum(d * d, keepdims=True))            # (1, 1)

    f1 = gram_fro(w1_ref[...])
    f2 = gram_fro(w2_ref[...])

    o_ref[...] = -cos_sum + alpha * (f1 + f2)


@partial(jax.jit, static_argnames=("alpha",))
def my_loss_func(t1, t2, w1, w2, *, alpha):
    """Fused single-launch Pallas loss. Returns a scalar f32."""
    kernel = partial(_loss_kernel, alpha=float(alpha), eps=1e-6)
    out = pl.pallas_call(
        kernel,
        out_shape=jax.ShapeDtypeStruct((1, 1), jnp.float32),
        # Gridless call: full-array blocks resident in VMEM, no pipeline prologue.
        in_specs=[pl.BlockSpec(memory_space=pltpu.MemorySpace.VMEM)] * 4,
        out_specs=pl.BlockSpec(memory_space=pltpu.MemorySpace.VMEM),
    )(t1, t2, w1, w2)
    return out[0, 0]


class MyLossFuncPallas:
    """JAX/Pallas equivalent of the PyTorch MyLossFunc module."""

    def __init__(self, alpha):
        self.alpha = float(alpha)

    def __call__(self, t1, t2, w1, w2):
        return my_loss_func(t1, t2, w1, w2, alpha=self.alpha)


if __name__ == "__main__":
    key = jax.random.PRNGKey(0)
    k_t1, k_t2, k_w1, k_w2 = jax.random.split(key, 4)

    # Shapes implied by linear-toy.py: t1/t2 are Net outputs (B, 100),
    # w1/w2 are the Linear weights (100, 200).
    B, OUT, IN = 8, 100, 200
    alpha = 0.5

    t1 = jax.random.normal(k_t1, (B, OUT), jnp.float32)
    t2 = jax.random.normal(k_t2, (B, OUT), jnp.float32)
    bound = IN ** -0.5
    w1 = jax.random.uniform(k_w1, (OUT, IN), jnp.float32, -bound, bound)
    w2 = jax.random.uniform(k_w2, (OUT, IN), jnp.float32, -bound, bound)

    loss_fn = MyLossFuncPallas(alpha)
    loss = loss_fn(t1, t2, w1, w2)
    jax.block_until_ready(loss)

    # --- plain-JAX reference -------------------------------------------------
    dot = jnp.sum(t1 * t2, axis=1)
    denom = jnp.maximum(
        jnp.linalg.norm(t1, axis=1) * jnp.linalg.norm(t2, axis=1), 1e-6
    )
    cos_sim = jnp.sum(dot / denom)
    eye = jnp.eye(OUT, dtype=jnp.float32)
    f1 = jnp.sqrt(jnp.sum((w1 @ w1.T - eye) ** 2))
    f2 = jnp.sqrt(jnp.sum((w2 @ w2.T - eye) ** 2))
    ref = -cos_sim + alpha * (f1 + f2)

    assert loss.shape == ()
    assert jnp.allclose(loss, ref, atol=1e-3, rtol=1e-3), (float(loss), float(ref))

    print("KERNEL_OK")
</pallas_src>

<mosaic_0001>
module attributes {stable_mosaic.version = 11 : i64} {
  func.func @_loss_kernel(%arg0: memref<8x100xf32, #tpu.memory_space<vmem>>, %arg1: memref<8x100xf32, #tpu.memory_space<vmem>>, %arg2: memref<100x200xf32, #tpu.memory_space<vmem>>, %arg3: memref<100x200xf32, #tpu.memory_space<vmem>>, %arg4: memref<1x1xf32, #tpu.memory_space<vmem>>) attributes {dimension_semantics = [], scalar_prefetch = 0 : i64, scratch_operands = 0 : i64, tpu.core_type = #tpu.core_type<tc>} {
    %c0 = arith.constant 0 : index
    %c0_0 = arith.constant 0 : index
    %0 = vector.load %arg0[%c0, %c0_0] : memref<8x100xf32, #tpu.memory_space<vmem>>, vector<8x100xf32>
    %c0_1 = arith.constant 0 : index
    %c0_2 = arith.constant 0 : index
    %1 = vector.load %arg1[%c0_1, %c0_2] : memref<8x100xf32, #tpu.memory_space<vmem>>, vector<8x100xf32>
    %2 = arith.mulf %0, %1 : vector<8x100xf32>
    %cst = arith.constant dense<0.000000e+00> : vector<8xf32>
    %3 = vector.multi_reduction <add>, %2, %cst [1] : vector<8x100xf32> to vector<8xf32>
    %4 = vector.shape_cast %3 : vector<8xf32> to vector<8x1xf32>
    %5 = arith.mulf %0, %0 : vector<8x100xf32>
    %cst_3 = arith.constant dense<0.000000e+00> : vector<8xf32>
    %6 = vector.multi_reduction <add>, %5, %cst_3 [1] : vector<8x100xf32> to vector<8xf32>
    %7 = vector.shape_cast %6 : vector<8xf32> to vector<8x1xf32>
    %8 = math.sqrt %7 : vector<8x1xf32>
    %9 = arith.mulf %1, %1 : vector<8x100xf32>
    %cst_4 = arith.constant dense<0.000000e+00> : vector<8xf32>
    %10 = vector.multi_reduction <add>, %9, %cst_4 [1] : vector<8x100xf32> to vector<8xf32>
    %11 = vector.shape_cast %10 : vector<8xf32> to vector<8x1xf32>
    %12 = math.sqrt %11 : vector<8x1xf32>
    %13 = arith.mulf %8, %12 : vector<8x1xf32>
    %cst_5 = arith.constant 9.99999997E-7 : f32
    %14 = vector.broadcast %cst_5 : f32 to vector<8x1xf32>
    %15 = arith.maximumf %13, %14 : vector<8x1xf32>
    %16 = arith.divf %4, %15 : vector<8x1xf32>
    %17 = vector.shape_cast %16 : vector<8x1xf32> to vector<1x8x1xf32>
    %cst_6 = arith.constant dense<0.000000e+00> : vector<1xf32>
    %18 = vector.multi_reduction <add>, %17, %cst_6 [1, 2] : vector<1x8x1xf32> to vector<1xf32>
    %19 = vector.shape_cast %18 : vector<1xf32> to vector<1x1x1xf32>
    %20 = vector.extract %19[0, 0, 0] : f32 from vector<1x1x1xf32>
    %21 = vector.broadcast %20 : f32 to vector<1x1xf32>
    %c0_7 = arith.constant 0 : index
    %c0_8 = arith.constant 0 : index
    %22 = vector.load %arg2[%c0_7, %c0_8] : memref<100x200xf32, #tpu.memory_space<vmem>>, vector<100x200xf32>
    %cst_9 = arith.constant dense<0.000000e+00> : vector<100x100xf32>
    %23 = tpu.matmul %22, %22, %cst_9 {dimension_numbers = #tpu.dot_dimension_numbers<[1], [1], [0], [0], [0, 0, 1, 0], [], []>} : vector<100x200xf32>, vector<100x200xf32>, vector<100x100xf32> -> vector<100x100xf32>
    %24 = tpu.iota {dimensions = array<i32: 0>} : vector<100x100xi32>
    %25 = tpu.iota {dimensions = array<i32: 1>} : vector<100x100xi32>
    %26 = arith.cmpi eq, %24, %25 : vector<100x100xi32>
    %cst_10 = arith.constant 1.000000e+00 : f32
    %cst_11 = arith.constant 0.000000e+00 : f32
    %27 = vector.broadcast %cst_10 : f32 to vector<100x100xf32>
    %28 = vector.broadcast %cst_11 : f32 to vector<100x100xf32>
    %29 = arith.select %26, %27, %28 : vector<100x100xi1>, vector<100x100xf32>
    %30 = arith.subf %23, %29 : vector<100x100xf32>
    %31 = arith.mulf %30, %30 : vector<100x100xf32>
    %32 = vector.shape_cast %31 : vector<100x100xf32> to vector<1x100x100xf32>
    %cst_12 = arith.constant dense<0.000000e+00> : vector<1xf32>
    %33 = vector.multi_reduction <add>, %32, %cst_12 [1, 2] : vector<1x100x100xf32> to vector<1xf32>
    %34 = vector.shape_cast %33 : vector<1xf32> to vector<1x1x1xf32>
    %35 = vector.extract %34[0, 0, 0] : f32 from vector<1x1x1xf32>
    %36 = vector.broadcast %35 : f32 to vector<1x1xf32>
    %37 = math.sqrt %36 : vector<1x1xf32>
    %c0_13 = arith.constant 0 : index
    %c0_14 = arith.constant 0 : index
    %38 = vector.load %arg3[%c0_13, %c0_14] : memref<100x200xf32, #tpu.memory_space<vmem>>, vector<100x200xf32>
    %cst_15 = arith.constant dense<0.000000e+00> : vector<100x100xf32>
    %39 = tpu.matmul %38, %38, %cst_15 {dimension_numbers = #tpu.dot_dimension_numbers<[1], [1], [0], [0], [0, 0, 1, 0], [], []>} : vector<100x200xf32>, vector<100x200xf32>, vector<100x100xf32> -> vector<100x100xf32>
    %40 = tpu.iota {dimensions = array<i32: 0>} : vector<100x100xi32>
    %41 = tpu.iota {dimensions = array<i32: 1>} : vector<100x100xi32>
    %42 = arith.cmpi eq, %40, %41 : vector<100x100xi32>
    %cst_16 = arith.constant 1.000000e+00 : f32
    %cst_17 = arith.constant 0.000000e+00 : f32
    %43 = vector.broadcast %cst_16 : f32 to vector<100x100xf32>
    %44 = vector.broadcast %cst_17 : f32 to vector<100x100xf32>
    %45 = arith.select %42, %43, %44 : vector<100x100xi1>, vector<100x100xf32>
    %46 = arith.subf %39, %45 : vector<100x100xf32>
    %47 = arith.mulf %46, %46 : vector<100x100xf32>
    %48 = vector.shape_cast %47 : vector<100x100xf32> to vector<1x100x100xf32>
    %cst_18 = arith.constant dense<0.000000e+00> : vector<1xf32>
    %49 = vector.multi_reduction <add>, %48, %cst_18 [1, 2] : vector<1x100x100xf32> to vector<1xf32>
    %50 = vector.shape_cast %49 : vector<1xf32> to vector<1x1x1xf32>
    %51 = vector.extract %50[0, 0, 0] : f32 from vector<1x1x1xf32>
    %52 = vector.broadcast %51 : f32 to vector<1x1xf32>
    %53 = math.sqrt %52 : vector<1x1xf32>
    %cst_19 = arith.constant 0.000000e+00 : f32
    %54 = vector.broadcast %cst_19 : f32 to vector<1x1xf32>
    %55 = arith.subf %54, %21 : vector<1x1xf32>
    %56 = arith.addf %37, %53 : vector<1x1xf32>
    %cst_20 = arith.constant 5.000000e-01 : f32
    %57 = vector.broadcast %cst_20 : f32 to vector<1x1xf32>
    %58 = arith.mulf %57, %56 : vector<1x1xf32>
    %59 = arith.addf %55, %58 : vector<1x1xf32>
    %c0_21 = arith.constant 0 : index
    %c0_22 = arith.constant 0 : index
    %60 = vector.load %arg4[%c0_21, %c0_22] : memref<1x1xf32, #tpu.memory_space<vmem>>, vector<1x1xf32>
    tpu.vector_store %arg4[%c0_21, %c0_22], %59 {strides = array<i32>} : memref<1x1xf32, #tpu.memory_space<vmem>>, vector<1x1xf32>,
    return
  }
}

</mosaic_0001>

<llo_original>
// kernel: my_loss_func.1
$region0: #{my_loss_func.1}
  #allocation0 [shape = 'u32[]', space=smem, size = 0x4, offset = 0x4, fixed_abs, tag = 'smem constant byte address 0x4 - core index']
  #allocation1 [shape = 'u32[144,128]{1,0:T(1,128)}', space=vmem, size = 0x12000, scoped, tag = 'internal scratch']
  %s0 = inlined_call_operand.vmem [shape: f32[8,100], index: 0, kind: input, shape index: {}]
  %s1 = inlined_call_operand.vmem [shape: f32[8,100], index: 1, kind: input, shape index: {}]
  %s2 = inlined_call_operand.vmem [shape: f32[100,200], index: 2, kind: input, shape index: {}]
  %s3 = inlined_call_operand.vmem [shape: f32[100,200], index: 3, kind: input, shape index: {}]
  %s4 = inlined_call_operand.hbm [shape: f32[1,1], index: 4, kind: output, shape index: {}]
  %s5 = sld [smem:[#allocation0]]
  $region26: #{my_loss_func.1} parent=0
    _
  %s7 = ssub.s32 1, %s5
  %s8 = scalar_select 0, %s7, %s5
  $region1: #{my_loss_func.1} parent=0
    #allocation2 [shape = 'u8[512]{0}', space=vmem, size = 0x400, scoped, tag = 'output window, operand 0, single buffered']
    #allocation3 [shape = 's32[1]{0}', space=sflag, size = 0x4, scoped, tag = 'scoped memory for my_loss_func.1']
    %9 = vsyncpa [#allocation3], 0
    // Predicated region
    $region2: #{my_loss_func.1} parent=1 // pred_check
      _
    $region3: #{my_loss_func.1} parent=1 // pred_check_branch
      %11 = sbr.rel (0) target = $region5
    $region4: #{my_loss_func.1} parent=1 // pred_region
      _
    $region5: #{my_loss_func.1} parent=1 // pred_fallthru
      _
    // Predicated region
    $region6: #{my_loss_func.1} parent=1 // pred_check
      _
    $region7: #{my_loss_func.1} parent=1 // pred_check_branch
      %13 = sbr.rel (0) target = $region9
    $region8: #{my_loss_func.1} parent=1 // pred_region
      _
    $region9: #{my_loss_func.1} parent=1 // pred_fallthru
      _
    // Predicated region
    $region10: #{my_loss_func.1} parent=1 // pred_check
      _
    $region11: #{my_loss_func.1} parent=1 // pred_check_branch
      %15 = sbr.rel (0) target = $region13
    $region12: #{my_loss_func.1} parent=1 // pred_region
      _
    $region13: #{my_loss_func.1} parent=1 // pred_fallthru
      _
    // Predicated region
    $region14: #{my_loss_func.1} parent=1 // pred_check
      _
    $region15: #{my_loss_func.1} parent=1 // pred_check_branch
      %17 = sbr.rel (0) target = $region17
    $region16: #{my_loss_func.1} parent=1 // pred_region
      _
    $region17: #{my_loss_func.1} parent=1 // pred_fallthru
      _
    %v18 = vld [vmem:[%s0] sm:$0xff]
    %v19 = vld [vmem:[%s1] sm:$0xff]
    %v20 = vmul.f32 %v18, %v19
    %vm21 = vcmask 818176
    %v22 = vsel %vm21, %v20, 0.0
    %23 = vadd.xlane.f32.xlu0 %v22
    %v24 = vpop.xlane.xlu0 %23
    %v25 = vmul.f32 %v18, %v18
    %v26 = vsel %vm21, %v25, 0.0
    %27 = vadd.xlane.f32.xlu0 %v26
    %v28 = vpop.xlane.xlu0 %27
    %v29 = vrsqrt.pop %v28
    %v30 = vmul.f32 %v28, %v29
    %vm31 = vcmp.eq.f32.partialorder %v28, inf
    %v32 = vsel %vm31, %v28, %v30
    %vm33 = vcmp.eq.f32.partialorder %v28, 0.0
    %v34 = vand.u32 %v28, 2147483648
    %v35 = vsel %vm33, %v34, %v32
    %v36 = vmul.f32 %v19, %v19
    %v37 = vsel %vm21, %v36, 0.0
    %38 = vadd.xlane.f32.xlu0 %v37
    %v39 = vpop.xlane.xlu0 %38
    %v40 = vrsqrt.pop %v39
    %v41 = vmul.f32 %v39, %v40
    %vm42 = vcmp.eq.f32.partialorder %v39, inf
    %v43 = vsel %vm42, %v39, %v41
    %vm44 = vcmp.eq.f32.partialorder %v39, 0.0
    %v45 = vand.u32 %v39, 2147483648
    %v46 = vsel %vm44, %v45, %v43
    %v47 = vmul.f32 %v35, %v46
    %v48 = vmax.f32 %v47, 1e-06
    %v49 = vrcp.pop %v48
    %v50 = vmul.f32 %v24, %v49
    %vm51 = vcmask 7168
    %v52 = vsel %vm51, %v50, 0.0
    %53 = vadd.xlane.f32.xlu0 %v52
    %v54 = vpop.xlane.xlu0 %53
    %v55 = vrot.slane %v54, 4
    %v56 = vadd.f32 %v54, %v55
    %v57 = vrot.slane %v56, 2
    %v58 = vadd.f32 %v56, %v57
    %v59 = vrot.slane %v58, 1
    %v60 = vadd.f32 %v58, %v59
    %s61 = vtos %v60
    %v62 = vstv %s61
    %v63 = vld [vmem:[%s2] sm:$0xff]
    %v64 = vld [vmem:[%s2 + $0x8] sm:$0xff]
    %v65 = vld [vmem:[%s2 + $0x10] sm:$0xff]
    %v66 = vld [vmem:[%s2 + $0x18] sm:$0xff]
    %v67 = vld [vmem:[%s2 + $0x20] sm:$0xff]
    %v68 = vld [vmem:[%s2 + $0x28] sm:$0xff]
    %v69 = vld [vmem:[%s2 + $0x30] sm:$0xff]
    %v70 = vld [vmem:[%s2 + $0x38] sm:$0xff]
    %v71 = vld [vmem:[%s2 + $0x40] sm:$0xff]
    %v72 = vld [vmem:[%s2 + $0x48] sm:$0xff]
    %v73 = vld [vmem:[%s2 + $0x50] sm:$0xff]
    %v74 = vld [vmem:[%s2 + $0x58] sm:$0xff]
    %v75 = vld [vmem:[%s2 + $0x60] sm:$0xff]
    %v76 = vld [vmem:[%s2 + $0x68] sm:$0xff]
    %v77 = vld [vmem:[%s2 + $0x70] sm:$0xff]
    %v78 = vld [vmem:[%s2 + $0x78] sm:$0xff]
    %v79 = vld [vmem:[%s2 + $0x80] sm:$0xff]
    %v80 = vld [vmem:[%s2 + $0x88] sm:$0xff]
    %v81 = vld [vmem:[%s2 + $0x90] sm:$0xff]
    %v82 = vld [vmem:[%s2 + $0x98] sm:$0xff]
    %v83 = vld [vmem:[%s2 + $0xa0] sm:$0xff]
    %v84 = vld [vmem:[%s2 + $0xa8] sm:$0xff]
    %v85 = vld [vmem:[%s2 + $0xb0] sm:$0xff]
    %v86 = vld [vmem:[%s2 + $0xb8] sm:$0xff]
    %v87 = vld [vmem:[%s2 + $0xc0] sm:$0xf]
    %v88 = vld [vmem:[%s2 + $0xc8] sm:$0xf]
    %vm89 = vcmask 588800
    %v91 = vsel %vm89, %v64, 0
    %v94 = vsel %vm89, %v66, 0
    %v97 = vsel %vm89, %v68, 0
    %v100 = vsel %vm89, %v70, 0
    %v103 = vsel %vm89, %v72, 0
    %v106 = vsel %vm89, %v74, 0
    %v109 = vsel %vm89, %v76, 0
    %v112 = vsel %vm89, %v78, 0
    %v115 = vsel %vm89, %v80, 0
    %v118 = vsel %vm89, %v82, 0
    %v121 = vsel %vm89, %v84, 0
    %v124 = vsel %vm89, %v86, 0
    %v127 = vsel %vm89, %v88, 0
    %129 = vmatprep.subr.mxu0 %v91
    %130 = vmatpush1.xpose.msra.mxu0 %v63
    %131 = vmatprep.subr.mxu0 %v94
    %132 = vmatpush1.xpose.msra.mxu0 %v65
    %133 = vmatprep.subr.mxu0 %v97
    %134 = vmatpush1.xpose.msra.mxu0 %v67
    %135 = vmatprep.subr.mxu0 %v100
    %136 = vmatpush1.xpose.msra.mxu0 %v69
    %137 = vmatprep.subr.mxu0 %v103
    %138 = vmatpush1.xpose.msra.mxu0 %v71
    %139 = vmatprep.subr.mxu0 %v106
    %140 = vmatpush1.xpose.msra.mxu0 %v73
    %141 = vmatprep.subr.mxu0 %v109
    %142 = vmatpush1.xpose.msra.mxu0 %v75
    %143 = vmatprep.subr.mxu0 %v112
    %144 = vmatpush1.xpose.msra.mxu0 %v77
    %145 = vmatprep.subr.mxu0 %v115
    %146 = vmatpush1.xpose.msra.mxu0 %v79
    %147 = vmatprep.subr.mxu0 %v118
    %148 = vmatpush1.xpose.msra.mxu0 %v81
    %149 = vmatprep.subr.mxu0 %v121
    %150 = vmatpush1.xpose.msra.mxu0 %v83
    %151 = vmatprep.subr.mxu0 %v124
    %152 = vmatpush1.xpose.msra.mxu0 %v85
    %153 = vmatprep.subr.mxu0 %v127
    %154 = vmatpush1.xpose.msra.mxu0 %v87
    %155 = vmatprep.subr.mxu0 0.0
    %156 = vmatpush1.xpose.msra.mxu0 0.0
    %157 = vmatprep.subr.mxu0 0.0
    %158 = vmatpush1.xpose.msra.mxu0 0.0
    %159 = vmatprep.subr.mxu0 0.0
    %160 = vmatpush1.xpose.msra.mxu0 0.0
    %161 = vmatprep.subr.mxu0 0.0
    %162 = vmatpush1.xpose.msra.mxu0 0.0
    %163 = vmatprep.subr.mxu0 0.0
    %164 = vmatpush1.xpose.msra.mxu0 0.0
    %165 = vmatprep.subr.mxu0 0.0
    %166 = vmatpush1.xpose.msra.mxu0 0.0
    %167 = vmatprep.subr.mxu0 0.0
    %168 = vmatpush1.xpose.msra.mxu0 0.0
    %169 = vmatprep.subr.mxu0 0.0
    %170 = vmatpush1.xpose.msra.mxu0 0.0
    %171 = vmatprep.subr.mxu0 0.0
    %172 = vmatpush1.xpose.msra.mxu0 0.0
    %173 = vmatprep.subr.mxu0 0.0
    %174 = vmatpush1.xpose.msra.mxu0 0.0
    %175 = vmatprep.subr.mxu0 0.0
    %176 = vmatpush1.xpose.msra.mxu0 0.0
    %177 = vmatprep.subr.mxu0 0.0
    %178 = vmatpush1.xpose.msra.mxu0 0.0
    %179 = vmatprep.subr.mxu0 0.0
    %180 = vmatpush1.xpose.msra.mxu0 0.0
    %181 = vmatprep.subr.mxu0 0.0
    %182 = vmatpush1.xpose.msra.mxu0 0.0
    %183 = vmatprep.subr.mxu0 0.0
    %184 = vmatpush1.xpose.msra.mxu0 0.0
    %185 = vmatprep.subr.mxu0 0.0
    %186 = vmatpush1.xpose.msra.mxu0 0.0
    %187 = vmatprep.subr.mxu0 0.0
    %188 = vmatpush1.xpose.msra.mxu0 0.0
    %189 = vmatprep.subr.mxu0 0.0
    %190 = vmatpush1.xpose.msra.mxu0 0.0
    %191 = vmatprep.subr.mxu0 0.0
    %192 = vmatpush1.xpose.msra.mxu0 0.0
    %193 = vmatprep.mubr.f32.mxu0 %v91
    %194 = vmatmul.mubr.f32.gmra.mrb[0].mxu0 %v63
    %v195 = vpop.f32.mrb[0].mxu0
    %v196 = vadd.f32 0.0, %v195
    %v197 = vpop.f32.mrb[0].mxu0
    %198 = vmatprep.mubr.f32.mxu0 %v94
    %199 = vmatmul.mubr.f32.gmra.mrb[0].mxu0 %v65
    %v200 = vpop.f32.mrb[0].mxu0
    %v201 = vadd.f32 0.0, %v200
    %v202 = vpop.f32.mrb[0].mxu0
    %203 = vmatprep.mubr.f32.mxu0 %v97
    %204 = vmatmul.mubr.f32.gmra.mrb[0].mxu0 %v67
    %v205 = vpop.f32.mrb[0].mxu0
    %v206 = vadd.f32 0.0, %v205
    %v207 = vpop.f32.mrb[0].mxu0
    %208 = vmatprep.mubr.f32.mxu0 %v100
    %209 = vmatmul.mubr.f32.gmra.mrb[0].mxu0 %v69
    %v210 = vpop.f32.mrb[0].mxu0
    %v211 = vadd.f32 0.0, %v210
    %v212 = vpop.f32.mrb[0].mxu0
    %213 = vmatprep.mubr.f32.mxu0 %v103
    %214 = vmatmul.mubr.f32.gmra.mrb[0].mxu0 %v71
    %v215 = vpop.f32.mrb[0].mxu0
    %v216 = vadd.f32 0.0, %v215
    %v217 = vpop.f32.mrb[0].mxu0
    %218 = vmatprep.mubr.f32.mxu0 %v106
    %219 = vmatmul.mubr.f32.gmra.mrb[0].mxu0 %v73
    %v220 = vpop.f32.mrb[0].mxu0
    %v221 = vadd.f32 0.0, %v220
    %v222 = vpop.f32.mrb[0].mxu0
    %223 = vmatprep.mubr.f32.mxu0 %v109
    %224 = vmatmul.mubr.f32.gmra.mrb[0].mxu0 %v75
    %v225 = vpop.f32.mrb[0].mxu0
    %v226 = vadd.f32 0.0, %v225
    %v227 = vpop.f32.mrb[0].mxu0
    %228 = vmatprep.mubr.f32.mxu0 %v112
    %229 = vmatmul.mubr.f32.gmra.mrb[0].mxu0 %v77
    %v230 = vpop.f32.mrb[0].mxu0
    %v231 = vadd.f32 0.0, %v230
    %v232 = vpop.f32.mrb[0].mxu0
    %233 = vmatprep.mubr.f32.mxu0 %v115
    %234 = vmatmul.mubr.f32.gmra.mrb[0].mxu0 %v79
    %v235 = vpop.f32.mrb[0].mxu0
    %v236 = vadd.f32 0.0, %v235
    %v237 = vpop.f32.mrb[0].mxu0
    %238 = vmatprep.mubr.f32.mxu0 %v118
    %239 = vmatmul.mubr.f32.gmra.mrb[0].mxu0 %v81
    %v240 = vpop.f32.mrb[0].mxu0
    %v241 = vadd.f32 0.0, %v240
    %v242 = vpop.f32.mrb[0].mxu0
    %243 = vmatprep.mubr.f32.mxu0 %v121
    %244 = vmatmul.mubr.f32.gmra.mrb[0].mxu0 %v83
    %v245 = vpop.f32.mrb[0].mxu0
    %v246 = vadd.f32 0.0, %v245
    %v247 = vpop.f32.mrb[0].mxu0
    %248 = vmatprep.mubr.f32.mxu0 %v124
    %249 = vmatmul.mubr.f32.gmra.mrb[0].mxu0 %v85
    %v250 = vpop.f32.mrb[0].mxu0
    %v251 = vadd.f32 0.0, %v250
    %v252 = vpop.f32.mrb[0].mxu0
    %253 = vmatprep.mubr.f32.mxu0 %v127
    %254 = vmatmul.mubr.f32.gmra.mrb[0].mxu0 %v87
    %v255 = vpop.f32.mrb[0].mxu0
    %v256 = vadd.f32 0.0, %v255
    %v257 = vpop.f32.mrb[0].mxu0
    %258 = vdwg.mxu0
    %v259 = vlaneseq
    %v260 = vshrl.u32 %v259, 7
    %v261 = vadd.s32 %v260, 8
    %v262 = vadd.s32 %v260, 16
    %v263 = vadd.s32 %v260, 24
    %v264 = vadd.s32 %v260, 32
    %v265 = vadd.s32 %v260, 40
    %v266 = vadd.s32 %v260, 48
    %v267 = vadd.s32 %v260, 56
    %v268 = vadd.s32 %v260, 64
    %v269 = vadd.s32 %v260, 72
    %v270 = vadd.s32 %v260, 80
    %v271 = vadd.s32 %v260, 88
    %v272 = vadd.s32 %v260, 96
    %v273 = vlaneseq
    %v274 = vand.u32 %v273, 127
    %vm275 = vcmp.eq.s32.totalorder %v260, %v274
    %vm276 = vcmp.eq.s32.totalorder %v261, %v274
    %vm277 = vcmp.eq.s32.totalorder %v262, %v274
    %vm278 = vcmp.eq.s32.totalorder %v263, %v274
    %vm279 = vcmp.eq.s32.totalorder %v264, %v274
    %vm280 = vcmp.eq.s32.totalorder %v265, %v274
    %vm281 = vcmp.eq.s32.totalorder %v266, %v274
    %vm282 = vcmp.eq.s32.totalorder %v267, %v274
    %vm283 = vcmp.eq.s32.totalorder %v268, %v274
    %vm284 = vcmp.eq.s32.totalorder %v269, %v274
    %vm285 = vcmp.eq.s32.totalorder %v270, %v274
    %vm286 = vcmp.eq.s32.totalorder %v271, %v274
    %vm287 = vcmp.eq.s32.totalorder %v272, %v274
    %v288 = vsel %vm275, 1.0, 0.0
    %v289 = vsel %vm276, 1.0, 0.0
    %v290 = vsel %vm277, 1.0, 0.0
    %v291 = vsel %vm278, 1.0, 0.0
    %v292 = vsel %vm279, 1.0, 0.0
    %v293 = vsel %vm280, 1.0, 0.0
    %v294 = vsel %vm281, 1.0, 0.0
    %v295 = vsel %vm282, 1.0, 0.0
    %v296 = vsel %vm283, 1.0, 0.0
    %v297 = vsel %vm284, 1.0, 0.0
    %v298 = vsel %vm285, 1.0, 0.0
    %v299 = vsel %vm286, 1.0, 0.0
    %v300 = vsel %vm287, 1.0, 0.0
    %v301 = vsub.f32 %v196, %v288
    %v302 = vsub.f32 %v201, %v289
    %v303 = vsub.f32 %v206, %v290
    %v304 = vsub.f32 %v211, %v291
    %v305 = vsub.f32 %v216, %v292
    %v306 = vsub.f32 %v221, %v293
    %v307 = vsub.f32 %v226, %v294
    %v308 = vsub.f32 %v231, %v295
    %v309 = vsub.f32 %v236, %v296
    %v310 = vsub.f32 %v241, %v297
    %v311 = vsub.f32 %v246, %v298
    %v312 = vsub.f32 %v251, %v299
    %v313 = vsub.f32 %v256, %v300
    %v314 = vmul.f32 %v301, %v301
    %v315 = vmul.f32 %v302, %v302
    %v316 = vmul.f32 %v303, %v303
    %v317 = vmul.f32 %v304, %v304
    %v318 = vmul.f32 %v305, %v305
    %v319 = vmul.f32 %v306, %v306
    %v320 = vmul.f32 %v307, %v307
    %v321 = vmul.f32 %v308, %v308
    %v322 = vmul.f32 %v309, %v309
    %v323 = vmul.f32 %v310, %v310
    %v324 = vmul.f32 %v311, %v311
    %v325 = vmul.f32 %v312, %v312
    %v326 = vmul.f32 %v313, %v313
    %v327 = vsel %vm21, %v314, 0.0
    %v328 = vsel %vm21, %v315, 0.0
    %v329 = vadd.f32 %v327, %v328
    %v330 = vsel %vm21, %v316, 0.0
    %v331 = vadd.f32 %v329, %v330
    %v332 = vsel %vm21, %v317, 0.0
    %v333 = vadd.f32 %v331, %v332
    %v334 = vsel %vm21, %v318, 0.0
    %v335 = vadd.f32 %v333, %v334
    %v336 = vsel %vm21, %v319, 0.0
    %v337 = vadd.f32 %v335, %v336
    %v338 = vsel %vm21, %v320, 0.0
    %v339 = vadd.f32 %v337, %v338
    %v340 = vsel %vm21, %v321, 0.0
    %v341 = vadd.f32 %v339, %v340
    %v342 = vsel %vm21, %v322, 0.0
    %v343 = vadd.f32 %v341, %v342
    %v344 = vsel %vm21, %v323, 0.0
    %v345 = vadd.f32 %v343, %v344
    %v346 = vsel %vm21, %v324, 0.0
    %v347 = vadd.f32 %v345, %v346
    %v348 = vsel %vm21, %v325, 0.0
    %v349 = vadd.f32 %v347, %v348
    %vm350 = vcmask 814080
    %v351 = vsel %vm350, %v326, 0.0
    %v352 = vadd.f32 %v349, %v351
    %353 = vadd.xlane.f32.xlu0 %v352
    %v354 = vpop.xlane.xlu0 %353
    %v355 = vrot.slane %v354, 4
    %v356 = vadd.f32 %v354, %v355
    %v357 = vrot.slane %v356, 2
    %v358 = vadd.f32 %v356, %v357
    %v359 = vrot.slane %v358, 1
    %v360 = vadd.f32 %v358, %v359
    %s361 = vtos %v360
    %v362 = vstv %s361
    %v363 = vrsqrt.pop %v362
    %v364 = vmul.f32 %v362, %v363
    %vm365 = vcmp.eq.f32.partialorder %v362, inf
    %v366 = vsel %vm365, %v362, %v364
    %vm367 = vcmp.eq.f32.partialorder %v362, 0.0
    %v368 = vand.u32 %v362, 2147483648
    %v369 = vsel %vm367, %v368, %v366
    %v370 = vld [vmem:[%s3] sm:$0xff]
    %v371 = vld [vmem:[%s3 + $0x8] sm:$0xff]
    %v372 = vld [vmem:[%s3 + $0x10] sm:$0xff]
    %v373 = vld [vmem:[%s3 + $0x18] sm:$0xff]
    %v374 = vld [vmem:[%s3 + $0x20] sm:$0xff]
    %v375 = vld [vmem:[%s3 + $0x28] sm:$0xff]
    %v376 = vld [vmem:[%s3 + $0x30] sm:$0xff]
    %v377 = vld [vmem:[%s3 + $0x38] sm:$0xff]
    %v378 = vld [vmem:[%s3 + $0x40] sm:$0xff]
    %v379 = vld [vmem:[%s3 + $0x48] sm:$0xff]
    %v380 = vld [vmem:[%s3 + $0x50] sm:$0xff]
    %v381 = vld [vmem:[%s3 + $0x58] sm:$0xff]
    %v382 = vld [vmem:[%s3 + $0x60] sm:$0xff]
    %v383 = vld [vmem:[%s3 + $0x68] sm:$0xff]
    %v384 = vld [vmem:[%s3 + $0x70] sm:$0xff]
    %v385 = vld [vmem:[%s3 + $0x78] sm:$0xff]
    %v386 = vld [vmem:[%s3 + $0x80] sm:$0xff]
    %v387 = vld [vmem:[%s3 + $0x88] sm:$0xff]
    %v388 = vld [vmem:[%s3 + $0x90] sm:$0xff]
    %v389 = vld [vmem:[%s3 + $0x98] sm:$0xff]
    %v390 = vld [vmem:[%s3 + $0xa0] sm:$0xff]
    %v391 = vld [vmem:[%s3 + $0xa8] sm:$0xff]
    %v392 = vld [vmem:[%s3 + $0xb0] sm:$0xff]
    %v393 = vld [vmem:[%s3 + $0xb8] sm:$0xff]
    %v394 = vld [vmem:[%s3 + $0xc0] sm:$0xf]
    %v395 = vld [vmem:[%s3 + $0xc8] sm:$0xf]
    %v397 = vsel %vm89, %v371, 0
    %v400 = vsel %vm89, %v373, 0
    %v403 = vsel %vm89, %v375, 0
    %v406 = vsel %vm89, %v377, 0
    %v409 = vsel %vm89, %v379, 0
    %v412 = vsel %vm89, %v381, 0
    %v415 = vsel %vm89, %v383, 0
    %v418 = vsel %vm89, %v385, 0
    %v421 = vsel %vm89, %v387, 0
    %v424 = vsel %vm89, %v389, 0
    %v427 = vsel %vm89, %v391, 0
    %v430 = vsel %vm89, %v393, 0
    %v433 = vsel %vm89, %v395, 0
    %435 = vmatprep.subr.mxu0 %v397
    %436 = vmatpush1.xpose.msra.mxu0 %v370
    %437 = vmatprep.subr.mxu0 %v400
    %438 = vmatpush1.xpose.msra.mxu0 %v372
    %439 = vmatprep.subr.mxu0 %v403
    %440 = vmatpush1.xpose.msra.mxu0 %v374
    %441 = vmatprep.subr.mxu0 %v406
    %442 = vmatpush1.xpose.msra.mxu0 %v376
    %443 = vmatprep.subr.mxu0 %v409
    %444 = vmatpush1.xpose.msra.mxu0 %v378
    %445 = vmatprep.subr.mxu0 %v412
    %446 = vmatpush1.xpose.msra.mxu0 %v380
    %447 = vmatprep.subr.mxu0 %v415
    %448 = vmatpush1.xpose.msra.mxu0 %v382
    %449 = vmatprep.subr.mxu0 %v418
    %450 = vmatpush1.xpose.msra.mxu0 %v384
    %451 = vmatprep.subr.mxu0 %v421
    %452 = vmatpush1.xpose.msra.mxu0 %v386
    %453 = vmatprep.subr.mxu0 %v424
    %454 = vmatpush1.xpose.msra.mxu0 %v388
    %455 = vmatprep.subr.mxu0 %v427
    %456 = vmatpush1.xpose.msra.mxu0 %v390
    %457 = vmatprep.subr.mxu0 %v430
    %458 = vmatpush1.xpose.msra.mxu0 %v392
    %459 = vmatprep.subr.mxu0 %v433
    %460 = vmatpush1.xpose.msra.mxu0 %v394
    %461 = vmatprep.subr.mxu0 0.0
    %462 = vmatpush1.xpose.msra.mxu0 0.0
    %463 = vmatprep.subr.mxu0 0.0
    %464 = vmatpush1.xpose.msra.mxu0 0.0
    %465 = vmatprep.subr.mxu0 0.0
    %466 = vmatpush1.xpose.msra.mxu0 0.0
    %467 = vmatprep.subr.mxu0 0.0
    %468 = vmatpush1.xpose.msra.mxu0 0.0
    %469 = vmatprep.subr.mxu0 0.0
    %470 = vmatpush1.xpose.msra.mxu0 0.0
    %471 = vmatprep.subr.mxu0 0.0
    %472 = vmatpush1.xpose.msra.mxu0 0.0
    %473 = vmatprep.subr.mxu0 0.0
    %474 = vmatpush1.xpose.msra.mxu0 0.0
    %475 = vmatprep.subr.mxu0 0.0
    %476 = vmatpush1.xpose.msra.mxu0 0.0
    %477 = vmatprep.subr.mxu0 0.0
    %478 = vmatpush1.xpose.msra.mxu0 0.0
    %479 = vmatprep.subr.mxu0 0.0
    %480 = vmatpush1.xpose.msra.mxu0 0.0
    %481 = vmatprep.subr.mxu0 0.0
    %482 = vmatpush1.xpose.msra.mxu0 0.0
    %483 = vmatprep.subr.mxu0 0.0
    %484 = vmatpush1.xpose.msra.mxu0 0.0
    %485 = vmatprep.subr.mxu0 0.0
    %486 = vmatpush1.xpose.msra.mxu0 0.0
    %487 = vmatprep.subr.mxu0 0.0
    %488 = vmatpush1.xpose.msra.mxu0 0.0
    %489 = vmatprep.subr.mxu0 0.0
    %490 = vmatpush1.xpose.msra.mxu0 0.0
    %491 = vmatprep.subr.mxu0 0.0
    %492 = vmatpush1.xpose.msra.mxu0 0.0
    %493 = vmatprep.subr.mxu0 0.0
    %494 = vmatpush1.xpose.msra.mxu0 0.0
    %495 = vmatprep.subr.mxu0 0.0
    %496 = vmatpush1.xpose.msra.mxu0 0.0
    %497 = vmatprep.subr.mxu0 0.0
    %498 = vmatpush1.xpose.msra.mxu0 0.0
    %499 = vmatprep.mubr.f32.mxu0 %v397
    %500 = vmatmul.mubr.f32.gmra.mrb[0].mxu0 %v370
    %v501 = vpop.f32.mrb[0].mxu0
    %v502 = vadd.f32 0.0, %v501
    %v503 = vpop.f32.mrb[0].mxu0
    %504 = vmatprep.mubr.f32.mxu0 %v400
    %505 = vmatmul.mubr.f32.gmra.mrb[0].mxu0 %v372
    %v506 = vpop.f32.mrb[0].mxu0
    %v507 = vadd.f32 0.0, %v506
    %v508 = vpop.f32.mrb[0].mxu0
    %509 = vmatprep.mubr.f32.mxu0 %v403
    %510 = vmatmul.mubr.f32.gmra.mrb[0].mxu0 %v374
    %v511 = vpop.f32.mrb[0].mxu0
    %v512 = vadd.f32 0.0, %v511
    %v513 = vpop.f32.mrb[0].mxu0
    %514 = vmatprep.mubr.f32.mxu0 %v406
    %515 = vmatmul.mubr.f32.gmra.mrb[0].mxu0 %v376
    %v516 = vpop.f32.mrb[0].mxu0
    %v517 = vadd.f32 0.0, %v516
    %v518 = vpop.f32.mrb[0].mxu0
    %519 = vmatprep.mubr.f32.mxu0 %v409
    %520 = vmatmul.mubr.f32.gmra.mrb[0].mxu0 %v378
    %v521 = vpop.f32.mrb[0].mxu0
    %v522 = vadd.f32 0.0, %v521
    %v523 = vpop.f32.mrb[0].mxu0
    %524 = vmatprep.mubr.f32.mxu0 %v412
    %525 = vmatmul.mubr.f32.gmra.mrb[0].mxu0 %v380
    %v526 = vpop.f32.mrb[0].mxu0
    %v527 = vadd.f32 0.0, %v526
    %v528 = vpop.f32.mrb[0].mxu0
    %529 = vmatprep.mubr.f32.mxu0 %v415
    %530 = vmatmul.mubr.f32.gmra.mrb[0].mxu0 %v382
    %v531 = vpop.f32.mrb[0].mxu0
    %v532 = vadd.f32 0.0, %v531
    %v533 = vpop.f32.mrb[0].mxu0
    %534 = vmatprep.mubr.f32.mxu0 %v418
    %535 = vmatmul.mubr.f32.gmra.mrb[0].mxu0 %v384
    %v536 = vpop.f32.mrb[0].mxu0
    %v537 = vadd.f32 0.0, %v536
    %v538 = vpop.f32.mrb[0].mxu0
    %539 = vmatprep.mubr.f32.mxu0 %v421
    %540 = vmatmul.mubr.f32.gmra.mrb[0].mxu0 %v386
    %v541 = vpop.f32.mrb[0].mxu0
    %v542 = vadd.f32 0.0, %v541
    %v543 = vpop.f32.mrb[0].mxu0
    %544 = vmatprep.mubr.f32.mxu0 %v424
    %545 = vmatmul.mubr.f32.gmra.mrb[0].mxu0 %v388
    %v546 = vpop.f32.mrb[0].mxu0
    %v547 = vadd.f32 0.0, %v546
    %v548 = vpop.f32.mrb[0].mxu0
    %549 = vmatprep.mubr.f32.mxu0 %v427
    %550 = vmatmul.mubr.f32.gmra.mrb[0].mxu0 %v390
    %v551 = vpop.f32.mrb[0].mxu0
    %v552 = vadd.f32 0.0, %v551
    %v553 = vpop.f32.mrb[0].mxu0
    %554 = vmatprep.mubr.f32.mxu0 %v430
    %555 = vmatmul.mubr.f32.gmra.mrb[0].mxu0 %v392
    %v556 = vpop.f32.mrb[0].mxu0
    %v557 = vadd.f32 0.0, %v556
    %v558 = vpop.f32.mrb[0].mxu0
    %559 = vmatprep.mubr.f32.mxu0 %v433
    %560 = vmatmul.mubr.f32.gmra.mrb[0].mxu0 %v394
    %v561 = vpop.f32.mrb[0].mxu0
    %v562 = vadd.f32 0.0, %v561
    %v563 = vpop.f32.mrb[0].mxu0
    %564 = vdwg.mxu0
    %v565 = vsub.f32 %v502, %v288
    %v566 = vsub.f32 %v507, %v289
    %v567 = vsub.f32 %v512, %v290
    %v568 = vsub.f32 %v517, %v291
    %v569 = vsub.f32 %v522, %v292
    %v570 = vsub.f32 %v527, %v293
    %v571 = vsub.f32 %v532, %v294
    %v572 = vsub.f32 %v537, %v295
    %v573 = vsub.f32 %v542, %v296
    %v574 = vsub.f32 %v547, %v297
    %v575 = vsub.f32 %v552, %v298
    %v576 = vsub.f32 %v557, %v299
    %v577 = vsub.f32 %v562, %v300
    %v578 = vmul.f32 %v565, %v565
    %v579 = vmul.f32 %v566, %v566
    %v580 = vmul.f32 %v567, %v567
    %v581 = vmul.f32 %v568, %v568
    %v582 = vmul.f32 %v569, %v569
    %v583 = vmul.f32 %v570, %v570
    %v584 = vmul.f32 %v571, %v571
    %v585 = vmul.f32 %v572, %v572
    %v586 = vmul.f32 %v573, %v573
    %v587 = vmul.f32 %v574, %v574
    %v588 = vmul.f32 %v575, %v575
    %v589 = vmul.f32 %v576, %v576
    %v590 = vmul.f32 %v577, %v577
    %v591 = vsel %vm21, %v578, 0.0
    %v592 = vsel %vm21, %v579, 0.0
    %v593 = vadd.f32 %v591, %v592
    %v594 = vsel %vm21, %v580, 0.0
    %v595 = vadd.f32 %v593, %v594
    %v596 = vsel %vm21, %v581, 0.0
    %v597 = vadd.f32 %v595, %v596
    %v598 = vsel %vm21, %v582, 0.0
    %v599 = vadd.f32 %v597, %v598
    %v600 = vsel %vm21, %v583, 0.0
    %v601 = vadd.f32 %v599, %v600
    %v602 = vsel %vm21, %v584, 0.0
    %v603 = vadd.f32 %v601, %v602
    %v604 = vsel %vm21, %v585, 0.0
    %v605 = vadd.f32 %v603, %v604
    %v606 = vsel %vm21, %v586, 0.0
    %v607 = vadd.f32 %v605, %v606
    %v608 = vsel %vm21, %v587, 0.0
    %v609 = vadd.f32 %v607, %v608
    %v610 = vsel %vm21, %v588, 0.0
    %v611 = vadd.f32 %v609, %v610
    %v612 = vsel %vm21, %v589, 0.0
    %v613 = vadd.f32 %v611, %v612
    %v614 = vsel %vm350, %v590, 0.0
    %v615 = vadd.f32 %v613, %v614
    %616 = vadd.xlane.f32.xlu0 %v615
    %v617 = vpop.xlane.xlu0 %616
    %v618 = vrot.slane %v617, 4
    %v619 = vadd.f32 %v617, %v618
    %v620 = vrot.slane %v619, 2
    %v621 = vadd.f32 %v619, %v620
    %v622 = vrot.slane %v621, 1
    %v623 = vadd.f32 %v621, %v622
    %s624 = vtos %v623
    %v625 = vstv %s624
    %v626 = vrsqrt.pop %v625
    %v627 = vmul.f32 %v625, %v626
    %vm628 = vcmp.eq.f32.partialorder %v625, inf
    %v629 = vsel %vm628, %v625, %v627
    %vm630 = vcmp.eq.f32.partialorder %v625, 0.0
    %v631 = vand.u32 %v625, 2147483648
    %v632 = vsel %vm630, %v631, %v629
    %v633 = vsub.f32 0.0, %v62
    %v634 = vadd.f32 %v369, %v632
    %v635 = vmul.f32 %v634, 0.5
    %v636 = vadd.f32 %v633, %v635
    %vm637 = vcmask 0
    %638 = vst.msk [vmem:[#allocation2] sm:$0x1] %vm637, %v636
    // Predicated region
    $region18: #{my_loss_func.1} parent=1 // pred_check
      _
    $region19: #{my_loss_func.1} parent=1 // pred_check_branch
      %640 = sbr.rel (0) target = $region21
    $region20: #{my_loss_func.1} parent=1 // pred_region
      %s642 = ssub.s32 16, 16
      %643 = vsyncadd [#allocation3], %s642
      %s645 = sshll.u32 [#allocation2], 4
      %s646 = int_to_ptr.vmem [resolvable:$true] %s645
      %648 = dma.vmem_to_hbm [thread:$0]  %s646, 16, %s4, [#allocation3]
    $region21: #{my_loss_func.1} parent=1 // pred_fallthru
      _
    // Predicated region
    $region22: #{my_loss_func.1} parent=1 // pred_check
      _
    $region23: #{my_loss_func.1} parent=1 // pred_check_branch
      %650 = sbr.rel (0) target = $region25
    $region24: #{my_loss_func.1} parent=1 // pred_region
      %651 = dma.done [#allocation3], 16
    $region25: #{my_loss_func.1} parent=1 // pred_fallthru
      _
    %652 = vsyncpa [#allocation3], 1

</llo_original>
